<compile_context>
chip_gen: v6e
topology: v6e:2x2x1
jax: 0.10.0
libtpu: 0.0.40
codegen_flags: <defaults>
</compile_context>

<pallas_src>
import math
from functools import partial

import jax
import jax.numpy as jnp
from jax import lax
from jax.experimental import pallas as pl
from jax.experimental.pallas import tpu as pltpu


# ---------------------------------------------------------------------------
# helpers
# ---------------------------------------------------------------------------
def _pick_tile(length: int, max_tile: int) -> int:
    """Largest multiple of 8 that divides `length` and is <= max_tile.

    Falls back to the full extent (single tile) if no such divisor exists,
    which is always legal (block == full array dim).
    """
    if length <= max_tile:
        return length
    t = max_tile - (max_tile % 8)
    while t >= 8:
        if length % t == 0:
            return t
        t -= 8
    return length


def _vmem_limit_bytes() -> int:
    """Scoped-VMEM request sized for the local chip (v5e/v6e: 128 MiB physical,
    v7x: 64 MiB).  Keeps headroom so double-buffering stays alive."""
    try:
        cap = pltpu.get_tpu_info().vmem_capacity_bytes
        return min(int(cap * 3 // 4), 96 * 1024 * 1024)
    except Exception:
        return 48 * 1024 * 1024


# ---------------------------------------------------------------------------
# kernels
# ---------------------------------------------------------------------------
def _flash_kernel(scale, q_ref, k_ref, v_ref, o_ref, m_sc, l_sc, acc_sc):
    """One (q_tile, k_tile) step of online-softmax attention for one (b, h)."""
    kv = pl.program_id(3)

    @pl.when(kv == 0)
    def _init():
        m_sc[...] = jnp.full(m_sc.shape, -jnp.inf, dtype=m_sc.dtype)
        l_sc[...] = jnp.zeros(l_sc.shape, dtype=l_sc.dtype)
        acc_sc[...] = jnp.zeros(acc_sc.shape, dtype=acc_sc.dtype)

    # scores = Q @ K^T * scale — contract the last dim of both operands so no
    # explicit K transpose is materialized; native-dtype operands, f32 acc.
    s = lax.dot_general(
        q_ref[...], k_ref[...],
        dimension_numbers=(((1,), (1,)), ((), ())),
        preferred_element_type=jnp.float32,
    ) * scale

    m_prev = m_sc[...]
    m_new = jnp.maximum(m_prev, jnp.max(s, axis=-1, keepdims=True))
    alpha = jnp.exp(m_prev - m_new)
    p = jnp.exp(s - m_new)

    l_sc[...] = alpha * l_sc[...] + jnp.sum(p, axis=-1, keepdims=True)
    acc_sc[...] = alpha * acc_sc[...] + jnp.dot(
        p.astype(v_ref.dtype), v_ref[...], preferred_element_type=jnp.float32)
    m_sc[...] = m_new

    @pl.when(kv == pl.num_programs(3) - 1)
    def _finalize():
        inv_l = pl.reciprocal(l_sc[...], approx=True)
        o_ref[...] = (acc_sc[...] * inv_l).astype(o_ref.dtype)


def _flash_abi_kernel(scale, q_ref, k_ref, va_ref, vb_ref, oa_ref, ob_ref,
                      m_sc, l_sc, acca_sc, accb_sc):
    """ABI variant: one shared softmax feeding two value matrices."""
    kv = pl.program_id(3)

    @pl.when(kv == 0)
    def _init():
        m_sc[...] = jnp.full(m_sc.shape, -jnp.inf, dtype=m_sc.dtype)
        l_sc[...] = jnp.zeros(l_sc.shape, dtype=l_sc.dtype)
        acca_sc[...] = jnp.zeros(acca_sc.shape, dtype=acca_sc.dtype)
        accb_sc[...] = jnp.zeros(accb_sc.shape, dtype=accb_sc.dtype)

    s = lax.dot_general(
        q_ref[...], k_ref[...],
        dimension_numbers=(((1,), (1,)), ((), ())),
        preferred_element_type=jnp.float32,
    ) * scale

    m_prev = m_sc[...]
    m_new = jnp.maximum(m_prev, jnp.max(s, axis=-1, keepdims=True))
    alpha = jnp.exp(m_prev - m_new)
    p = jnp.exp(s - m_new)

    l_sc[...] = alpha * l_sc[...] + jnp.sum(p, axis=-1, keepdims=True)
    pa = p.astype(va_ref.dtype)
    acca_sc[...] = alpha * acca_sc[...] + jnp.dot(
        pa, va_ref[...], preferred_element_type=jnp.float32)
    accb_sc[...] = alpha * accb_sc[...] + jnp.dot(
        p.astype(vb_ref.dtype), vb_ref[...], preferred_element_type=jnp.float32)
    m_sc[...] = m_new

    @pl.when(kv == pl.num_programs(3) - 1)
    def _finalize():
        inv_l = pl.reciprocal(l_sc[...], approx=True)
        oa_ref[...] = (acca_sc[...] * inv_l).astype(oa_ref.dtype)
        ob_ref[...] = (accb_sc[...] * inv_l).astype(ob_ref.dtype)


# ---------------------------------------------------------------------------
# wrappers
# ---------------------------------------------------------------------------
def flash_attention(Q, K, V, *, q_tile=256, k_tile=512):
    """
    Q: [B, H, Lq, Dk]   K: [B, H, Lk, Dk]   V: [B, H, Lk, Dv]
    returns context [B, H, Lq, Dv] (flash style: no attention matrix output).
    """
    B, H, Lq, Dk = Q.shape
    Lk = K.shape[2]
    Dv = V.shape[-1]
    scale = 1.0 / math.sqrt(Dk)

    tq = _pick_tile(Lq, q_tile)
    tk = _pick_tile(Lk, k_tile)
    grid = (B, H, Lq // tq, Lk // tk)

    itemsize = jnp.dtype(Q.dtype).itemsize
    cost = pl.CostEstimate(
        flops=2 * B * H * Lq * Lk * (Dk + Dv),
        transcendentals=B * H * Lq * Lk,
        bytes_accessed=(Q.size + K.size + V.size + B * H * Lq * Dv) * itemsize,
    )

    return pl.pallas_call(
        partial(_flash_kernel, scale),
        out_shape=jax.ShapeDtypeStruct((B, H, Lq, Dv), Q.dtype),
        grid=grid,
        in_specs=[
            pl.BlockSpec((None, None, tq, Dk), lambda b, h, qi, ki: (b, h, qi, 0)),
            pl.BlockSpec((None, None, tk, Dk), lambda b, h, qi, ki: (b, h, ki, 0)),
            pl.BlockSpec((None, None, tk, Dv), lambda b, h, qi, ki: (b, h, ki, 0)),
        ],
        out_specs=pl.BlockSpec((None, None, tq, Dv),
                               lambda b, h, qi, ki: (b, h, qi, 0)),
        scratch_shapes=[
            pltpu.VMEM((tq, 1), jnp.float32),   # running max
            pltpu.VMEM((tq, 1), jnp.float32),   # running sum
            pltpu.VMEM((tq, Dv), jnp.float32),  # context accumulator
        ],
        compiler_params=pltpu.CompilerParams(
            dimension_semantics=("parallel", "parallel", "parallel", "arbitrary"),
            vmem_limit_bytes=_vmem_limit_bytes(),
        ),
        cost_estimate=cost,
    )(Q, K, V)


def flash_attention_abi(Q, K, V_A, V_B, *, q_tile=256, k_tile=512):
    """
    ABI attention: one softmax over Q@K^T shared by two value matrices.
    Q: [B, H, Lq, Dk]   K: [B, H, Lk, Dk]   V_A, V_B: [B, H, Lk, Dv]
    returns (context_a, context_b), each [B, H, Lq, Dv].
    """
    B, H, Lq, Dk = Q.shape
    Lk = K.shape[2]
    Dv = V_A.shape[-1]
    scale = 1.0 / math.sqrt(Dk)

    tq = _pick_tile(Lq, q_tile)
    tk = _pick_tile(Lk, k_tile)
    grid = (B, H, Lq // tq, Lk // tk)

    itemsize = jnp.dtype(Q.dtype).itemsize
    cost = pl.CostEstimate(
        flops=2 * B * H * Lq * Lk * (Dk + 2 * Dv),
        transcendentals=B * H * Lq * Lk,
        bytes_accessed=(Q.size + K.size + V_A.size + V_B.size
                        + 2 * B * H * Lq * Dv) * itemsize,
    )

    return pl.pallas_call(
        partial(_flash_abi_kernel, scale),
        out_shape=(
            jax.ShapeDtypeStruct((B, H, Lq, Dv), Q.dtype),
            jax.ShapeDtypeStruct((B, H, Lq, Dv), Q.dtype),
        ),
        grid=grid,
        in_specs=[
            pl.BlockSpec((None, None, tq, Dk), lambda b, h, qi, ki: (b, h, qi, 0)),
            pl.BlockSpec((None, None, tk, Dk), lambda b, h, qi, ki: (b, h, ki, 0)),
            pl.BlockSpec((None, None, tk, Dv), lambda b, h, qi, ki: (b, h, ki, 0)),
            pl.BlockSpec((None, None, tk, Dv), lambda b, h, qi, ki: (b, h, ki, 0)),
        ],
        out_specs=(
            pl.BlockSpec((None, None, tq, Dv), lambda b, h, qi, ki: (b, h, qi, 0)),
            pl.BlockSpec((None, None, tq, Dv), lambda b, h, qi, ki: (b, h, qi, 0)),
        ),
        scratch_shapes=[
            pltpu.VMEM((tq, 1), jnp.float32),
            pltpu.VMEM((tq, 1), jnp.float32),
            pltpu.VMEM((tq, Dv), jnp.float32),
            pltpu.VMEM((tq, Dv), jnp.float32),
        ],
        compiler_params=pltpu.CompilerParams(
            dimension_semantics=("parallel", "parallel", "parallel", "arbitrary"),
            vmem_limit_bytes=_vmem_limit_bytes(),
        ),
        cost_estimate=cost,
    )(Q, K, V_A, V_B)


# ---------------------------------------------------------------------------
# reference + smoke test
# ---------------------------------------------------------------------------
def _ref_sdpa(Q, K, V):
    Dk = Q.shape[-1]
    scores = jnp.einsum("bhqd,bhkd->bhqk", Q, K) / jnp.sqrt(jnp.float32(Dk))
    attn = jax.nn.softmax(scores, axis=-1)
    return jnp.einsum("bhqk,bhkd->bhqd", attn, V)


if __name__ == "__main__":
    key = jax.random.PRNGKey(0)

    # --- small shapes matching the module convention [B, n_heads, seq, depth] ---
    B, H, Lq, Lk, Dk, Dv = 2, 4, 8, 8, 32, 32
    kq, kk, kva, kvb, k2 = jax.random.split(key, 5)
    Q = jax.random.normal(kq, (B, H, Lq, Dk), dtype=jnp.float32)
    K = jax.random.normal(kk, (B, H, Lk, Dk), dtype=jnp.float32)
    V_A = jax.random.normal(kva, (B, H, Lk, Dv), dtype=jnp.float32)
    V_B = jax.random.normal(kvb, (B, H, Lk, Dv), dtype=jnp.float32)

    ctx = flash_attention(Q, K, V_A)
    ctx_a, ctx_b = flash_attention_abi(Q, K, V_A, V_B)
    jax.block_until_ready((ctx, ctx_a, ctx_b))

    ref_a = _ref_sdpa(Q, K, V_A)
    ref_b = _ref_sdpa(Q, K, V_B)
    assert ctx.shape == (B, H, Lq, Dv)
    assert jnp.allclose(ctx, ref_a, atol=2e-3, rtol=2e-3)
    assert jnp.allclose(ctx_a, ref_a, atol=2e-3, rtol=2e-3)
    assert jnp.allclose(ctx_b, ref_b, atol=2e-3, rtol=2e-3)

    # --- larger shape exercising the tiled online-softmax path (multi k-tiles) ---
    B2, H2, L2, D2 = 1, 2, 256, 64
    kq2, kk2, kv2 = jax.random.split(k2, 3)
    Q2 = jax.random.normal(kq2, (B2, H2, L2, D2), dtype=jnp.float32)
    K2 = jax.random.normal(kk2, (B2, H2, L2, D2), dtype=jnp.float32)
    V2 = jax.random.normal(kv2, (B2, H2, L2, D2), dtype=jnp.float32)
    ctx2 = flash_attention(Q2, K2, V2, q_tile=128, k_tile=128)
    jax.block_until_ready(ctx2)
    assert jnp.allclose(ctx2, _ref_sdpa(Q2, K2, V2), atol=2e-3, rtol=2e-3)

    print("KERNEL_OK")
</pallas_src>

<mosaic_0001>
module attributes {stable_mosaic.version = 11 : i64} {
  func.func @_flash_kernel(%arg0: i32, %arg1: i32, %arg2: i32, %arg3: i32, %arg4: memref<1x1x8x32xf32, #tpu.memory_space<vmem>>, %arg5: memref<1x1x8x32xf32, #tpu.memory_space<vmem>>, %arg6: memref<1x1x8x32xf32, #tpu.memory_space<vmem>>, %arg7: memref<1x1x8x32xf32, #tpu.memory_space<vmem>>, %arg8: memref<8x1xf32, #tpu.memory_space<vmem>>, %arg9: memref<8x1xf32, #tpu.memory_space<vmem>>, %arg10: memref<8x32xf32, #tpu.memory_space<vmem>>) attributes {dimension_semantics = [#tpu.dimension_semantics<parallel>, #tpu.dimension_semantics<parallel>, #tpu.dimension_semantics<parallel>, #tpu.dimension_semantics<arbitrary>], iteration_bounds = array<i64: 2, 4, 1, 1>, scalar_prefetch = 0 : i64, scratch_operands = 3 : i64, tpu.core_type = #tpu.core_type<tc>, window_params = [{transform_indices = @transform_0, window_bounds = array<i64: 1, 1, 8, 32>}, {transform_indices = @transform_1, window_bounds = array<i64: 1, 1, 8, 32>}, {transform_indices = @transform_2, window_bounds = array<i64: 1, 1, 8, 32>}, {transform_indices = @transform_3, window_bounds = array<i64: 1, 1, 8, 32>}]} {
    %c0_i32 = arith.constant 0 : i32
    %0 = arith.cmpi eq, %arg3, %c0_i32 : i32
    %1 = arith.extui %0 : i1 to i32
    %c0_i32_0 = arith.constant 0 : i32
    %2 = arith.cmpi ne, %1, %c0_i32_0 : i32
    scf.if %2 {
      %cst_30 = arith.constant 0xFF800000 : f32
      %37 = vector.broadcast %cst_30 : f32 to vector<8x1xf32>
      %c0_31 = arith.constant 0 : index
      %c0_32 = arith.constant 0 : index
      %38 = vector.load %arg8[%c0_31, %c0_32] : memref<8x1xf32, #tpu.memory_space<vmem>>, vector<8x1xf32>
      tpu.vector_store %arg8[%c0_31, %c0_32], %37 {strides = array<i32>} : memref<8x1xf32, #tpu.memory_space<vmem>>, vector<8x1xf32>,
      %cst_33 = arith.constant 0.000000e+00 : f32
      %39 = vector.broadcast %cst_33 : f32 to vector<8x1xf32>
      %c0_34 = arith.constant 0 : index
      %c0_35 = arith.constant 0 : index
      %40 = vector.load %arg9[%c0_34, %c0_35] : memref<8x1xf32, #tpu.memory_space<vmem>>, vector<8x1xf32>
      tpu.vector_store %arg9[%c0_34, %c0_35], %39 {strides = array<i32>} : memref<8x1xf32, #tpu.memory_space<vmem>>, vector<8x1xf32>,
      %cst_36 = arith.constant 0.000000e+00 : f32
      %41 = vector.broadcast %cst_36 : f32 to vector<8x32xf32>
      %c0_37 = arith.constant 0 : index
      %c0_38 = arith.constant 0 : index
      %42 = vector.load %arg10[%c0_37, %c0_38] : memref<8x32xf32, #tpu.memory_space<vmem>>, vector<8x32xf32>
      tpu.vector_store %arg10[%c0_37, %c0_38], %41 {strides = array<i32>} : memref<8x32xf32, #tpu.memory_space<vmem>>, vector<8x32xf32>,
    } else {
    }
    %c0 = arith.constant 0 : index
    %c0_1 = arith.constant 0 : index
    %c0_2 = arith.constant 0 : index
    %c0_3 = arith.constant 0 : index
    %3 = vector.load %arg4[%c0, %c0_1, %c0_2, %c0_3] : memref<1x1x8x32xf32, #tpu.memory_space<vmem>>, vector<1x1x8x32xf32>
    %4 = vector.shape_cast %3 : vector<1x1x8x32xf32> to vector<8x32xf32>
    %c0_4 = arith.constant 0 : index
    %c0_5 = arith.constant 0 : index
    %c0_6 = arith.constant 0 : index
    %c0_7 = arith.constant 0 : index
    %5 = vector.load %arg5[%c0_4, %c0_5, %c0_6, %c0_7] : memref<1x1x8x32xf32, #tpu.memory_space<vmem>>, vector<1x1x8x32xf32>
    %6 = vector.shape_cast %5 : vector<1x1x8x32xf32> to vector<8x32xf32>
    %cst = arith.constant dense<0.000000e+00> : vector<8x8xf32>
    %7 = tpu.matmul %4, %6, %cst {dimension_numbers = #tpu.dot_dimension_numbers<[1], [1], [0], [0], [0, 0, 1, 0], [], []>} : vector<8x32xf32>, vector<8x32xf32>, vector<8x8xf32> -> vector<8x8xf32>
    %cst_8 = arith.constant 0.176776692 : f32
    %8 = vector.broadcast %cst_8 : f32 to vector<8x8xf32>
    %9 = arith.mulf %7, %8 : vector<8x8xf32>
    %c0_9 = arith.constant 0 : index
    %c0_10 = arith.constant 0 : index
    %10 = vector.load %arg8[%c0_9, %c0_10] : memref<8x1xf32, #tpu.memory_space<vmem>>, vector<8x1xf32>
    %cst_11 = arith.constant dense<0xFF800000> : vector<8xf32>
    %11 = vector.multi_reduction <maximumf>, %9, %cst_11 [1] : vector<8x8xf32> to vector<8xf32>
    %12 = vector.shape_cast %11 : vector<8xf32> to vector<8x1xf32>
    %13 = arith.maximumf %10, %12 : vector<8x1xf32>
    %14 = arith.subf %10, %13 : vector<8x1xf32>
    %15 = math.exp %14 : vector<8x1xf32>
    %16 = vector.broadcast %13 : vector<8x1xf32> to vector<8x8xf32>
    %17 = arith.subf %9, %16 : vector<8x8xf32>
    %18 = math.exp %17 : vector<8x8xf32>
    %c0_12 = arith.constant 0 : index
    %c0_13 = arith.constant 0 : index
    %19 = vector.load %arg9[%c0_12, %c0_13] : memref<8x1xf32, #tpu.memory_space<vmem>>, vector<8x1xf32>
    %20 = arith.mulf %15, %19 : vector<8x1xf32>
    %cst_14 = arith.constant dense<0.000000e+00> : vector<8xf32>
    %21 = vector.multi_reduction <add>, %18, %cst_14 [1] : vector<8x8xf32> to vector<8xf32>
    %22 = vector.shape_cast %21 : vector<8xf32> to vector<8x1xf32>
    %23 = arith.addf %20, %22 : vector<8x1xf32>
    %c0_15 = arith.constant 0 : index
    %c0_16 = arith.constant 0 : index
    %24 = vector.load %arg9[%c0_15, %c0_16] : memref<8x1xf32, #tpu.memory_space<vmem>>, vector<8x1xf32>
    tpu.vector_store %arg9[%c0_15, %c0_16], %23 {strides = array<i32>} : memref<8x1xf32, #tpu.memory_space<vmem>>, vector<8x1xf32>,
    %c0_17 = arith.constant 0 : index
    %c0_18 = arith.constant 0 : index
    %25 = vector.load %arg10[%c0_17, %c0_18] : memref<8x32xf32, #tpu.memory_space<vmem>>, vector<8x32xf32>
    %26 = vector.broadcast %15 : vector<8x1xf32> to vector<8x32xf32>
    %27 = arith.mulf %26, %25 : vector<8x32xf32>
    %c0_19 = arith.constant 0 : index
    %c0_20 = arith.constant 0 : index
    %c0_21 = arith.constant 0 : index
    %c0_22 = arith.constant 0 : index
    %28 = vector.load %arg6[%c0_19, %c0_20, %c0_21, %c0_22] : memref<1x1x8x32xf32, #tpu.memory_space<vmem>>, vector<1x1x8x32xf32>
    %29 = vector.shape_cast %28 : vector<1x1x8x32xf32> to vector<8x32xf32>
    %cst_23 = arith.constant dense<0.000000e+00> : vector<8x32xf32>
    %30 = tpu.matmul %18, %29, %cst_23 {dimension_numbers = #tpu.dot_dimension_numbers<[1], [0], [0], [1], [0, 0, 1, 1], [], []>} : vector<8x8xf32>, vector<8x32xf32>, vector<8x32xf32> -> vector<8x32xf32>
    %31 = arith.addf %27, %30 : vector<8x32xf32>
    %c0_24 = arith.constant 0 : index
    %c0_25 = arith.constant 0 : index
    %32 = vector.load %arg10[%c0_24, %c0_25] : memref<8x32xf32, #tpu.memory_space<vmem>>, vector<8x32xf32>
    tpu.vector_store %arg10[%c0_24, %c0_25], %31 {strides = array<i32>} : memref<8x32xf32, #tpu.memory_space<vmem>>, vector<8x32xf32>,
    %c0_26 = arith.constant 0 : index
    %c0_27 = arith.constant 0 : index
    %33 = vector.load %arg8[%c0_26, %c0_27] : memref<8x1xf32, #tpu.memory_space<vmem>>, vector<8x1xf32>
    tpu.vector_store %arg8[%c0_26, %c0_27], %13 {strides = array<i32>} : memref<8x1xf32, #tpu.memory_space<vmem>>, vector<8x1xf32>,
    %c0_i32_28 = arith.constant 0 : i32
    %34 = arith.cmpi eq, %arg3, %c0_i32_28 : i32
    %35 = arith.extui %34 : i1 to i32
    %c0_i32_29 = arith.constant 0 : i32
    %36 = arith.cmpi ne, %35, %c0_i32_29 : i32
    scf.if %36 {
      %c0_30 = arith.constant 0 : index
      %c0_31 = arith.constant 0 : index
      %37 = vector.load %arg9[%c0_30, %c0_31] : memref<8x1xf32, #tpu.memory_space<vmem>>, vector<8x1xf32>
      %38 = tpu.reciprocal %37 {approx = true} : vector<8x1xf32> -> vector<8x1xf32>
      %c0_32 = arith.constant 0 : index
      %c0_33 = arith.constant 0 : index
      %39 = vector.load %arg10[%c0_32, %c0_33] : memref<8x32xf32, #tpu.memory_space<vmem>>, vector<8x32xf32>
      %40 = vector.broadcast %38 : vector<8x1xf32> to vector<8x32xf32>
      %41 = arith.mulf %39, %40 : vector<8x32xf32>
      %c0_34 = arith.constant 0 : index
      %c0_35 = arith.constant 0 : index
      %c0_36 = arith.constant 0 : index
      %c0_37 = arith.constant 0 : index
      %42 = vector.load %arg7[%c0_34, %c0_35, %c0_36, %c0_37] : memref<1x1x8x32xf32, #tpu.memory_space<vmem>>, vector<1x1x8x32xf32>
      %43 = vector.shape_cast %42 : vector<1x1x8x32xf32> to vector<8x32xf32>
      %44 = vector.shape_cast %41 : vector<8x32xf32> to vector<1x1x8x32xf32>
      tpu.vector_store %arg7[%c0_34, %c0_35, %c0_36, %c0_37], %44 {strides = array<i32>} : memref<1x1x8x32xf32, #tpu.memory_space<vmem>>, vector<1x1x8x32xf32>,
    } else {
    }
    return
  }
  func.func @transform_0(%arg0: i32, %arg1: i32, %arg2: i32, %arg3: i32) -> (i32, i32, i32, i32) {
    %c0_i32 = arith.constant 0 : i32
    %c0_i32_0 = arith.constant 0 : i32
    return %arg0, %arg1, %arg2, %c0_i32 : i32, i32, i32, i32
  }
  func.func @transform_1(%arg0: i32, %arg1: i32, %arg2: i32, %arg3: i32) -> (i32, i32, i32, i32) {
    %c0_i32 = arith.constant 0 : i32
    %c0_i32_0 = arith.constant 0 : i32
    return %arg0, %arg1, %arg3, %c0_i32 : i32, i32, i32, i32
  }
  func.func @transform_2(%arg0: i32, %arg1: i32, %arg2: i32, %arg3: i32) -> (i32, i32, i32, i32) {
    %c0_i32 = arith.constant 0 : i32
    %c0_i32_0 = arith.constant 0 : i32
    return %arg0, %arg1, %arg3, %c0_i32 : i32, i32, i32, i32
  }
  func.func @transform_3(%arg0: i32, %arg1: i32, %arg2: i32, %arg3: i32) -> (i32, i32, i32, i32) {
    %c0_i32 = arith.constant 0 : i32
    %c0_i32_0 = arith.constant 0 : i32
    return %arg0, %arg1, %arg2, %c0_i32 : i32, i32, i32, i32
  }
}

</mosaic_0001>

<llo_original>
// kernel: tpu_custom_call.1
$region0: #{tpu_custom_call.1}
  #allocation0 [shape = 'u32[]', space=smem, size = 0x4, offset = 0x4, fixed_abs, tag = 'smem constant byte address 0x4 - core index']
  #allocation1 [shape = 'u32[144,128]{1,0:T(1,128)}', space=vmem, size = 0x12000, scoped, tag = 'internal scratch']
  #allocation2 [shape = 'f32[8,1]{1,0:T(8,128)}', space=vmem, size = 0x1000, scoped, tag = 'scratch operand']
  #allocation3 [shape = 'f32[8,1]{1,0:T(8,128)}', space=vmem, size = 0x1000, scoped, tag = 'scratch operand']
  #allocation4 [shape = 'f32[8,32]{1,0:T(8,128)}', space=vmem, size = 0x1000, scoped, tag = 'scratch operand']
  %s0 = inlined_call_operand.hbm [shape: f32[2,4,8,32], index: 0, kind: input, shape index: {}]
  %s1 = inlined_call_operand.hbm [shape: f32[2,4,8,32], index: 1, kind: input, shape index: {}]
  %s2 = inlined_call_operand.hbm [shape: f32[2,4,8,32], index: 2, kind: input, shape index: {}]
  %s3 = inlined_call_operand.hbm [shape: f32[2,4,8,32], index: 3, kind: output, shape index: {}]
  %s4 = sld [smem:[#allocation0]]
  $region65: #{tpu_custom_call.1} parent=0
    _
  %s6 = ssub.s32 1, %s4
  %s7 = scalar_select 0, %s6, %s4
  $region1: #{tpu_custom_call.1} parent=0
    #allocation5 [shape = 'u8[8192]{0}', space=vmem, size = 0x2000, scoped, tag = 'input window, operand 0']
    #allocation6 [shape = 's32[2]{0}', space=sflag, size = 0x8, scoped, tag = 'scoped memory for tpu_custom_call.1']
    #allocation7 [shape = 's32[2]{0}', space=sflag, size = 0x8, scoped, tag = 'scoped memory for tpu_custom_call.1']
    #allocation8 [shape = 'u8[8192]{0}', space=vmem, size = 0x2000, scoped, tag = 'input window, operand 1']
    #allocation9 [shape = 's32[2]{0}', space=sflag, size = 0x8, scoped, tag = 'scoped memory for tpu_custom_call.1']
    #allocation10 [shape = 'u8[8192]{0}', space=vmem, size = 0x2000, scoped, tag = 'input window, operand 2']
    #allocation11 [shape = 'u8[8192]{0}', space=vmem, size = 0x2000, scoped, tag = 'output window, operand 0']
    %8 = vsyncpa [#allocation6], 0
    %s9 = scalar_lea.sflag [#allocation6], 1
    %10 = vsyncpa %s9, 0
    %11 = vsyncpa [#allocation9], 0
    %s12 = scalar_lea.sflag [#allocation9], 1
    %13 = vsyncpa %s12, 0
    %14 = vsyncpa [#allocation7], 0
    %s15 = scalar_lea.sflag [#allocation7], 1
    %16 = vsyncpa %s15, 0
    loop: start=0, step=1, limit=10
    $region2: #{tpu_custom_call.1} parent=1 // loop_pre_header
      _
    $region3: #{tpu_custom_call.1} parent=1 // loop_header
      %s18 = sphi 0, %s22
      %p19 = scmp.ge.s32.totalorder %s18, 10
      %s25 = sphi 0, %s51
      %s26 = sphi 0, %s47
      %s27 = sphi 0, %s43
      %s28 = sphi 0, %s39
      %s29 = sphi 0, %s25
      %s30 = sphi 0, %s26
      %s31 = sphi 0, %s27
      %s32 = sphi 0, %s28
      %s33 = sphi 0, %s29
      %s34 = sphi 0, %s30
      %s35 = sphi 0, %s31
      %s36 = sphi 0, %s32
      %s58 = sphi 0, %s60
      %s61 = sphi 0, %s58
      %s62 = sphi 0, %s61
      %s78 = sphi 0, %s62
      %s88 = sphi 0, %s90
      %s91 = sphi 0, %s88
      %s92 = sphi 0, %s91
      %s108 = sphi 0, %s92
      %s118 = sphi 0, %s120
      %s121 = sphi 0, %s118
      %s122 = sphi 0, %s121
      %s138 = sphi 0, %s122
      %s148 = sphi 0, %s150
      %s151 = sphi 0, %s148
      %s152 = sphi 0, %s151
      %s168 = sphi 0, %s152
    $region4: #{tpu_custom_call.1} parent=1 // loop_header_branch
      %21 = sbr.rel (%p19) target = $region8
    $region5: #{tpu_custom_call.1} parent=1 // loop_body
      %s23 = ssub.s32 %s18, 1
      %s24 = ssub.s32 %s18, 2
      %s37 = sadd.s32 1, %s28
      %p38 = scmp.ge.s32.totalorder %s37, 1
      %s39 = scalar_select %p38, 0, %s37
      %s40 = sadd.s32 1, %s27
      %s41 = scalar_select %p38, %s40, %s27
      %p42 = scmp.ge.s32.totalorder %s41, 1
      %s43 = scalar_select %p42, 0, %s41
      %s44 = sadd.s32 1, %s26
      %s45 = scalar_select %p42, %s44, %s26
      %p46 = scmp.ge.s32.totalorder %s45, 4
      %s47 = scalar_select %p46, 0, %s45
      %s48 = sadd.s32 1, %s25
      %s49 = scalar_select %p46, %s48, %s25
      %p50 = scmp.ge.s32.totalorder %s49, 2
      %s51 = scalar_select %p50, 0, %s49
      %s52 = ssub.s32 %s25, %s51
      %s53 = ssub.s32 %s26, %s47
      %s54 = sor.u32 %s52, %s53
      %s55 = ssub.s32 %s27, %s43
      %s56 = sor.u32 %s54, %s55
      %p57 = scmp.eq.s32.totalorder %s56, 0
      %s59 = sadd.s32 %s58, 1
      %s60 = scalar_select %p57, %s58, %s59
      %p63 = pneg %p57
      %p64 = scmp.eq.s32.totalorder %s18, 7
      %p65 = por %p63, %p64
      %p66 = scmp.ne.s32.totalorder %s58, %s61
      %p67 = scmp.eq.s32.totalorder %s18, 0
      %p68 = por %p66, %p67
      %p69 = scmp.ne.s32.totalorder %s58, %s61
      %p70 = scmp.eq.s32.totalorder %s23, 7
      %p71 = por %p69, %p70
      %p72 = scmp.ne.s32.totalorder %s61, %s62
      %p73 = scmp.eq.s32.totalorder %s23, 0
      %p74 = por %p72, %p73
      %p75 = scmp.ne.s32.totalorder %s61, %s62
      %p76 = scmp.eq.s32.totalorder %s24, 7
      %p77 = por %p75, %p76
      %p79 = scmp.ne.s32.totalorder %s62, %s78
      %p80 = scmp.eq.s32.totalorder %s24, 0
      %p81 = por %p79, %p80
      %s82 = ssub.s32 %s25, %s51
      %s83 = ssub.s32 %s26, %s47
      %s84 = sor.u32 %s82, %s83
      %s85 = ssub.s32 %s28, %s39
      %s86 = sor.u32 %s84, %s85
      %p87 = scmp.eq.s32.totalorder %s86, 0
      %s89 = sadd.s32 %s88, 1
      %s90 = scalar_select %p87, %s88, %s89
      %p93 = pneg %p87
      %p94 = scmp.eq.s32.totalorder %s18, 7
      %p95 = por %p93, %p94
      %p96 = scmp.ne.s32.totalorder %s88, %s91
      %p97 = scmp.eq.s32.totalorder %s18, 0
      %p98 = por %p96, %p97
      %p99 = scmp.ne.s32.totalorder %s88, %s91
      %p100 = scmp.eq.s32.totalorder %s23, 7
      %p101 = por %p99, %p100
      %p102 = scmp.ne.s32.totalorder %s91, %s92
      %p103 = scmp.eq.s32.totalorder %s23, 0
      %p104 = por %p102, %p103
      %p105 = scmp.ne.s32.totalorder %s91, %s92
      %p106 = scmp.eq.s32.totalorder %s24, 7
      %p107 = por %p105, %p106
      %p109 = scmp.ne.s32.totalorder %s92, %s108
      %p110 = scmp.eq.s32.totalorder %s24, 0
      %p111 = por %p109, %p110
      %s112 = ssub.s32 %s25, %s51
      %s113 = ssub.s32 %s26, %s47
      %s114 = sor.u32 %s112, %s113
      %s115 = ssub.s32 %s28, %s39
      %s116 = sor.u32 %s114, %s115
      %p117 = scmp.eq.s32.totalorder %s116, 0
      %s119 = sadd.s32 %s118, 1
      %s120 = scalar_select %p117, %s118, %s119
      %p123 = pneg %p117
      %p124 = scmp.eq.s32.totalorder %s18, 7
      %p125 = por %p123, %p124
      %p126 = scmp.ne.s32.totalorder %s118, %s121
      %p127 = scmp.eq.s32.totalorder %s18, 0
      %p128 = por %p126, %p127
      %p129 = scmp.ne.s32.totalorder %s118, %s121
      %p130 = scmp.eq.s32.totalorder %s23, 7
      %p131 = por %p129, %p130
      %p132 = scmp.ne.s32.totalorder %s121, %s122
      %p133 = scmp.eq.s32.totalorder %s23, 0
      %p134 = por %p132, %p133
      %p135 = scmp.ne.s32.totalorder %s121, %s122
      %p136 = scmp.eq.s32.totalorder %s24, 7
      %p137 = por %p135, %p136
      %p139 = scmp.ne.s32.totalorder %s122, %s138
      %p140 = scmp.eq.s32.totalorder %s24, 0
      %p141 = por %p139, %p140
      %s142 = ssub.s32 %s25, %s51
      %s143 = ssub.s32 %s26, %s47
      %s144 = sor.u32 %s142, %s143
      %s145 = ssub.s32 %s27, %s43
      %s146 = sor.u32 %s144, %s145
      %p147 = scmp.eq.s32.totalorder %s146, 0
      %s149 = sadd.s32 %s148, 1
      %s150 = scalar_select %p147, %s148, %s149
      %p153 = pneg %p147
      %p154 = scmp.eq.s32.totalorder %s18, 7
      %p155 = por %p153, %p154
      %p156 = scmp.ne.s32.totalorder %s148, %s151
      %p157 = scmp.eq.s32.totalorder %s18, 0
      %p158 = por %p156, %p157
      %p159 = scmp.ne.s32.totalorder %s148, %s151
      %p160 = scmp.eq.s32.totalorder %s23, 7
      %p161 = por %p159, %p160
      %p162 = scmp.ne.s32.totalorder %s151, %s152
      %p163 = scmp.eq.s32.totalorder %s23, 0
      %p164 = por %p162, %p163
      %p165 = scmp.ne.s32.totalorder %s151, %s152
      %p166 = scmp.eq.s32.totalorder %s24, 7
      %p167 = por %p165, %p166
      %p169 = scmp.ne.s32.totalorder %s152, %s168
      %p170 = scmp.eq.s32.totalorder %s24, 0
      %p171 = por %p169, %p170
      %p172 = scmp.le.s32.totalorder 1, %s18
      %p173 = scmp.lt.s32.totalorder %s18, 9
      %p174 = pnand %p172, %p173
      %p175 = pneg %p174
      // Predicated region
      $region9: #{tpu_custom_call.1} parent=5 // pred_check
        _
      $region10: #{tpu_custom_call.1} parent=5 // pred_check_branch
        %177 = sbr.rel (%p174) target = $region12
      $region11: #{tpu_custom_call.1} parent=5 // pred_region
        %s178 = ssub.s32 %s18, 1
      $region12: #{tpu_custom_call.1} parent=5 // pred_fallthru
        _
      %p179 = scmp.lt.s32.totalorder %s18, 8
      // Predicated region
      $region13: #{tpu_custom_call.1} parent=5 // pred_check
        %p180 = pneg %p179
      $region14: #{tpu_custom_call.1} parent=5 // pred_check_branch
        %182 = sbr.rel (%p180) target = $region16
      $region15: #{tpu_custom_call.1} parent=5 // pred_region
        // Predicated region
        $region17: #{tpu_custom_call.1} parent=15 // pred_check
          %p183 = pneg %p68
        $region18: #{tpu_custom_call.1} parent=15 // pred_check_branch
          %185 = sbr.rel (%p183) target = $region20
        $region19: #{tpu_custom_call.1} parent=15 // pred_region
          %s186 = sand.u32 %s58, 1
          %s187 = scalar_lea.sflag [#allocation6], %s186
          %s188 = sand.u32 %s58, 1
          %s189 = smul.addr %s188, 8
          %s190 = scalar_lea.vmem [#allocation5], %s189
          %s192 = ssub.s32 128, 128
          %193 = vsyncadd %s187, %s192
          %s194 = sadd.s32 %s27, %s26
          %s195 = smul.addr %s25, 4
          %s196 = sadd.s32 %s194, %s195
          %s197 = smul.addr %s196, 128
          %s198 = scalar_lea.hbm %s0, %s197
          %s200 = sshll.u32 %s190, 4
          %s201 = int_to_ptr.vmem [resolvable:$true] %s200
          %203 = dma.hbm_to_vmem [thread:$0]  %s198, 128, %s201, %s187
        $region20: #{tpu_custom_call.1} parent=15 // pred_fallthru
          _
        // Predicated region
        $region21: #{tpu_custom_call.1} parent=15 // pred_check
          %p204 = pneg %p98
        $region22: #{tpu_custom_call.1} parent=15 // pred_check_branch
          %206 = sbr.rel (%p204) target = $region24
        $region23: #{tpu_custom_call.1} parent=15 // pred_region
          %s207 = sand.u32 %s18, 1
          %s208 = scalar_lea.sflag [#allocation9], %s207
          %s209 = sand.u32 %s88, 1
          %s210 = smul.addr %s209, 8
          %s211 = scalar_lea.vmem [#allocation8], %s210
          %s213 = ssub.s32 128, 128
          %214 = vsyncadd %s208, %s213
          %s215 = sadd.s32 %s28, %s26
          %s216 = smul.addr %s25, 4
          %s217 = sadd.s32 %s215, %s216
          %s218 = smul.addr %s217, 128
          %s219 = scalar_lea.hbm %s1, %s218
          %s221 = sshll.u32 %s211, 4
          %s222 = int_to_ptr.vmem [resolvable:$true] %s221
          %224 = dma.hbm_to_vmem [thread:$0]  %s219, 128, %s222, %s208
        $region24: #{tpu_custom_call.1} parent=15 // pred_fallthru
          _
        // Predicated region
        $region25: #{tpu_custom_call.1} parent=15 // pred_check
          %p225 = pneg %p128
        $region26: #{tpu_custom_call.1} parent=15 // pred_check_branch
          %227 = sbr.rel (%p225) target = $region28
        $region27: #{tpu_custom_call.1} parent=15 // pred_region
          %s228 = sand.u32 %s18, 1
          %s229 = scalar_lea.sflag [#allocation9], %s228
          %s230 = sand.u32 %s118, 1
          %s231 = smul.addr %s230, 8
          %s232 = scalar_lea.vmem [#allocation10], %s231
          %s234 = ssub.s32 128, 128
          %235 = vsyncadd %s229, %s234
          %s236 = sadd.s32 %s28, %s26
          %s237 = smul.addr %s25, 4
          %s238 = sadd.s32 %s236, %s237
          %s239 = smul.addr %s238, 128
          %s240 = scalar_lea.hbm %s2, %s239
          %s242 = sshll.u32 %s232, 4
          %s243 = int_to_ptr.vmem [resolvable:$true] %s242
          %245 = dma.hbm_to_vmem [thread:$0]  %s240, 128, %s243, %s229
        $region28: #{tpu_custom_call.1} parent=15 // pred_fallthru
          _
      $region16: #{tpu_custom_call.1} parent=5 // pred_fallthru
        _
      %p246 = scmp.le.s32.totalorder 1, %s18
      %p247 = scmp.lt.s32.totalorder %s18, 9
      %p248 = pnand %p246, %p247
      %p249 = pneg %p248
      // Predicated region
      $region29: #{tpu_custom_call.1} parent=5 // pred_check
        _
      $region30: #{tpu_custom_call.1} parent=5 // pred_check_branch
        %251 = sbr.rel (%p248) target = $region32
      $region31: #{tpu_custom_call.1} parent=5 // pred_region
        %s252 = ssub.s32 %s18, 1
        %s253 = sand.u32 %s61, 1
        %s254 = scalar_lea.sflag [#allocation6], %s253
        %s255 = sand.u32 %s61, 1
        %s256 = smul.addr %s255, 8
        %s257 = scalar_lea.vmem [#allocation5], %s256
        // Predicated region
        $region33: #{tpu_custom_call.1} parent=31 // pred_check
          %p258 = pneg %p74
        $region34: #{tpu_custom_call.1} parent=31 // pred_check_branch
          %260 = sbr.rel (%p258) target = $region36
        $region35: #{tpu_custom_call.1} parent=31 // pred_region
          %261 = dma.done %s254, 128
        $region36: #{tpu_custom_call.1} parent=31 // pred_fallthru
          _
        %s262 = sand.u32 %s23, 1
        %s263 = scalar_lea.sflag [#allocation9], %s262
        %s264 = sand.u32 %s91, 1
        %s265 = smul.addr %s264, 8
        %s266 = scalar_lea.vmem [#allocation8], %s265
        // Predicated region
        $region37: #{tpu_custom_call.1} parent=31 // pred_check
          %p267 = pneg %p104
        $region38: #{tpu_custom_call.1} parent=31 // pred_check_branch
          %269 = sbr.rel (%p267) target = $region40
        $region39: #{tpu_custom_call.1} parent=31 // pred_region
          %270 = dma.done %s263, 128
        $region40: #{tpu_custom_call.1} parent=31 // pred_fallthru
          _
        %s271 = sand.u32 %s23, 1
        %s272 = scalar_lea.sflag [#allocation9], %s271
        %s273 = sand.u32 %s121, 1
        %s274 = smul.addr %s273, 8
        %s275 = scalar_lea.vmem [#allocation10], %s274
        // Predicated region
        $region41: #{tpu_custom_call.1} parent=31 // pred_check
          %p276 = pneg %p134
        $region42: #{tpu_custom_call.1} parent=31 // pred_check_branch
          %278 = sbr.rel (%p276) target = $region44
        $region43: #{tpu_custom_call.1} parent=31 // pred_region
          %279 = dma.done %s272, 128
        $region44: #{tpu_custom_call.1} parent=31 // pred_fallthru
          _
        %s280 = sand.u32 %s61, 1
        %s281 = scalar_lea.sflag [#allocation6], %s280
        %s282 = sand.u32 %s61, 1
        %s283 = smul.addr %s282, 8
        %s284 = scalar_lea.vmem [#allocation5], %s283
        %p285 = pneg %p74
        %p286 = pneg %p71
        %s287 = sand.u32 %s23, 1
        %s288 = scalar_lea.sflag [#allocation9], %s287
        %s289 = sand.u32 %s91, 1
        %s290 = smul.addr %s289, 8
        %s291 = scalar_lea.vmem [#allocation8], %s290
        %p292 = pneg %p104
        %p293 = pneg %p101
        %s294 = sand.u32 %s23, 1
        %s295 = scalar_lea.sflag [#allocation9], %s294
        %s296 = sand.u32 %s121, 1
        %s297 = smul.addr %s296, 8
        %s298 = scalar_lea.vmem [#allocation10], %s297
        %p299 = pneg %p134
        %p300 = pneg %p131
        %p301 = pneg %p164
        %p302 = pneg %p161
        %s303 = sand.u32 %s151, 1
        %s304 = scalar_lea.sflag [#allocation7], %s303
        %s305 = sand.u32 %s151, 1
        %s306 = smul.addr %s305, 8
        %s307 = scalar_lea.vmem [#allocation11], %s306
        %p308 = scmp.eq.s32.totalorder %s32, 0
        // Predicated region
        $region45: #{tpu_custom_call.1} parent=31 // pred_check
          %p309 = pneg %p308
        $region46: #{tpu_custom_call.1} parent=31 // pred_check_branch
          %311 = sbr.rel (%p309) target = $region48
        $region47: #{tpu_custom_call.1} parent=31 // pred_region
          %vm312 = vcmask 7168
          %313 = vst.msk [vmem:[#allocation2] sm:$0xff] %vm312, -inf
          %314 = vst.msk [vmem:[#allocation3] sm:$0xff] %vm312, 0.0
          %vm315 = vcmask 261120
          %316 = vst.msk [vmem:[#allocation4] sm:$0xff] %vm315, 0.0
        $region48: #{tpu_custom_call.1} parent=31 // pred_fallthru
          _
        %v317 = vld [vmem:[%s257] sm:$0xff]
        %v318 = vld [vmem:[%s266] sm:$0xff]
        %vm319 = vcmask 261120
        %v321 = vsel %vm319, %v317, 0
        %v324 = vsel %vm319, %v318, 0
        %326 = vmatprep.subr.mxu0 0.0
        %327 = vmatpush1.xpose.msra.mxu0 0.0
        %328 = vmatprep.subr.mxu0 0.0
        %329 = vmatpush1.xpose.msra.mxu0 0.0
        %330 = vmatprep.subr.mxu0 0.0
        %331 = vmatpush1.xpose.msra.mxu0 0.0
        %332 = vmatprep.subr.mxu0 0.0
        %333 = vmatpush1.xpose.msra.mxu0 0.0
        %334 = vmatprep.subr.mxu0 0.0
        %335 = vmatpush1.xpose.msra.mxu0 0.0
        %336 = vmatprep.subr.mxu0 0.0
        %337 = vmatpush1.xpose.msra.mxu0 0.0
        %338 = vmatprep.subr.mxu0 0.0
        %339 = vmatpush1.xpose.msra.mxu0 0.0
        %340 = vmatprep.subr.mxu0 0.0
        %341 = vmatpush1.xpose.msra.mxu0 0.0
        %342 = vmatprep.subr.mxu0 0.0
        %343 = vmatpush1.xpose.msra.mxu0 0.0
        %344 = vmatprep.subr.mxu0 0.0
        %345 = vmatpush1.xpose.msra.mxu0 0.0
        %346 = vmatprep.subr.mxu0 0.0
        %347 = vmatpush1.xpose.msra.mxu0 0.0
        %348 = vmatprep.subr.mxu0 0.0
        %349 = vmatpush1.xpose.msra.mxu0 0.0
        %350 = vmatprep.subr.mxu0 0.0
        %351 = vmatpush1.xpose.msra.mxu0 0.0
        %352 = vmatprep.subr.mxu0 0.0
        %353 = vmatpush1.xpose.msra.mxu0 0.0
        %354 = vmatprep.subr.mxu0 0.0
        %355 = vmatpush1.xpose.msra.mxu0 0.0
        %356 = vmatprep.subr.mxu0 0.0
        %357 = vmatpush1.xpose.msra.mxu0 %v324
        %358 = vmatprep.subr.mxu0 0.0
        %359 = vmatpush2.xpose.msra.mxu0 0.0
        %360 = vmatprep.subr.mxu0 0.0
        %361 = vmatpush2.xpose.msra.mxu0 0.0
        %362 = vmatprep.subr.mxu0 0.0
        %363 = vmatpush2.xpose.msra.mxu0 0.0
        %364 = vmatprep.subr.mxu0 0.0
        %365 = vmatpush2.xpose.msra.mxu0 0.0
        %366 = vmatprep.subr.mxu0 0.0
        %367 = vmatpush2.xpose.msra.mxu0 0.0
        %368 = vmatprep.subr.mxu0 0.0
        %369 = vmatpush2.xpose.msra.mxu0 0.0
        %370 = vmatprep.subr.mxu0 0.0
        %371 = vmatpush2.xpose.msra.mxu0 0.0
        %372 = vmatprep.subr.mxu0 0.0
        %373 = vmatpush2.xpose.msra.mxu0 0.0
        %374 = vmatprep.subr.mxu0 0.0
        %375 = vmatpush2.xpose.msra.mxu0 0.0
        %376 = vmatprep.subr.mxu0 0.0
        %377 = vmatpush2.xpose.msra.mxu0 0.0
        %378 = vmatprep.subr.mxu0 0.0
        %379 = vmatpush2.xpose.msra.mxu0 0.0
        %380 = vmatprep.subr.mxu0 0.0
        %381 = vmatpush2.xpose.msra.mxu0 0.0
        %382 = vmatprep.subr.mxu0 0.0
        %383 = vmatpush2.xpose.msra.mxu0 0.0
        %384 = vmatprep.subr.mxu0 0.0
        %385 = vmatpush2.xpose.msra.mxu0 0.0
        %386 = vmatprep.subr.mxu0 0.0
        %387 = vmatpush2.xpose.msra.mxu0 0.0
        %388 = vmatprep.subr.mxu0 0.0
        %389 = vmatpush2.xpose.msra.mxu0 0.0
        %390 = vmatprep.mubr.f32.mxu0 0.0
        %391 = vmatmul.mubr.f32.gmra.mxu0 %v321
        %v392 = vpop.f32.mrf.mxu0
        %v393 = vadd.f32 0.0, %v392
        %v394 = vpop.f32.mrf.mxu0
        %395 = vdwg.mxu0
        %v396 = vmul.f32 %v393, 0.17677669
        %v397 = vld [vmem:[#allocation2] sm:$0xff]
        %vm398 = vcmask 64512
        %v399 = vsel %vm398, %v396, -inf
        %400 = vmax.xlane.f32.xlu0 %v399
        %v401 = vpop.xlane.xlu0 %400
        %v402 = vmax.f32 %v397, %v401
        %v403 = vsub.f32 %v397, %v402
        %v404 = vmul.f32 %v403, 1.442695
        %v405 = vpow.pop %v404
        %407 = vset.pattern.permute.xlu0 0
        %408 = vperm.xlu0 %407, %v402
        %v409 = vpop.permute.xlu0 %408
        %v411 = vsub.f32 %v396, %v409
        %v412 = vmul.f32 %v411, 1.442695
        %v413 = vpow.pop %v412
        %v414 = vld [vmem:[#allocation3] sm:$0xff]
        %v415 = vmul.f32 %v405, %v414
        %v416 = vsel %vm398, %v413, 0.0
        %417 = vadd.xlane.f32.xlu0 %v416
        %v418 = vpop.xlane.xlu0 %417
        %v419 = vadd.f32 %v415, %v418
        %vm420 = vcmask 7168
        %421 = vst.msk [vmem:[#allocation3] sm:$0xff] %vm420, %v419
        %v422 = vld [vmem:[#allocation4] sm:$0xff]
        %424 = vset.pattern.permute.xlu0 0
        %425 = vperm.xlu0 %424, %v405
        %v426 = vpop.permute.xlu0 %425
        %v428 = vmul.f32 %v426, %v422
        %v429 = vld [vmem:[%s275] sm:$0xff]
        %v431 = vsel %vm398, %v413, 0
        %433 = vmatprep.subr.mxu0 0.0
        %434 = vmatpush1.msra.mxu0 0.0
        %435 = vmatprep.subr.mxu0 0.0
        %436 = vmatpush1.msra.mxu0 0.0
        %437 = vmatprep.subr.mxu0 0.0
        %438 = vmatpush1.msra.mxu0 0.0
        %439 = vmatprep.subr.mxu0 0.0
        %440 = vmatpush1.msra.mxu0 0.0
        %441 = vmatprep.subr.mxu0 0.0
        %442 = vmatpush1.msra.mxu0 0.0
        %443 = vmatprep.subr.mxu0 0.0
        %444 = vmatpush1.msra.mxu0 0.0
        %445 = vmatprep.subr.mxu0 0.0
        %446 = vmatpush1.msra.mxu0 0.0
        %447 = vmatprep.subr.mxu0 0.0
        %448 = vmatpush1.msra.mxu0 0.0
        %449 = vmatprep.subr.mxu0 0.0
        %450 = vmatpush1.msra.mxu0 0.0
        %451 = vmatprep.subr.mxu0 0.0
        %452 = vmatpush1.msra.mxu0 0.0
        %453 = vmatprep.subr.mxu0 0.0
        %454 = vmatpush1.msra.mxu0 0.0
        %455 = vmatprep.subr.mxu0 0.0
        %456 = vmatpush1.msra.mxu0 0.0
        %457 = vmatprep.subr.mxu0 0.0
        %458 = vmatpush1.msra.mxu0 0.0
        %459 = vmatprep.subr.mxu0 0.0
        %460 = vmatpush1.msra.mxu0 0.0
        %461 = vmatprep.subr.mxu0 0.0
        %462 = vmatpush1.msra.mxu0 0.0
        %463 = vmatprep.subr.mxu0 0.0
        %464 = vmatpush1.msra.mxu0 %v429
        %465 = vmatprep.subr.mxu0 0.0
        %466 = vmatpush2.msra.mxu0 0.0
        %467 = vmatprep.subr.mxu0 0.0
        %468 = vmatpush2.msra.mxu0 0.0
        %469 = vmatprep.subr.mxu0 0.0
        %470 = vmatpush2.msra.mxu0 0.0
        %471 = vmatprep.subr.mxu0 0.0
        %472 = vmatpush2.msra.mxu0 0.0
        %473 = vmatprep.subr.mxu0 0.0
        %474 = vmatpush2.msra.mxu0 0.0
        %475 = vmatprep.subr.mxu0 0.0
        %476 = vmatpush2.msra.mxu0 0.0
        %477 = vmatprep.subr.mxu0 0.0
        %478 = vmatpush2.msra.mxu0 0.0
        %479 = vmatprep.subr.mxu0 0.0
        %480 = vmatpush2.msra.mxu0 0.0
        %481 = vmatprep.subr.mxu0 0.0
        %482 = vmatpush2.msra.mxu0 0.0
        %483 = vmatprep.subr.mxu0 0.0
        %484 = vmatpush2.msra.mxu0 0.0
        %485 = vmatprep.subr.mxu0 0.0
        %486 = vmatpush2.msra.mxu0 0.0
        %487 = vmatprep.subr.mxu0 0.0
        %488 = vmatpush2.msra.mxu0 0.0
        %489 = vmatprep.subr.mxu0 0.0
        %490 = vmatpush2.msra.mxu0 0.0
        %491 = vmatprep.subr.mxu0 0.0
        %492 = vmatpush2.msra.mxu0 0.0
        %493 = vmatprep.subr.mxu0 0.0
        %494 = vmatpush2.msra.mxu0 0.0
        %495 = vmatprep.subr.mxu0 0.0
        %496 = vmatpush2.msra.mxu0 0.0
        %497 = vmatprep.mubr.f32.mxu0 0.0
        %498 = vmatmul.mubr.f32.gmra.mxu0 %v431
        %v499 = vpop.f32.mrf.mxu0
        %v500 = vadd.f32 0.0, %v499
        %v501 = vpop.f32.mrf.mxu0
        %502 = vdwg.mxu0
        %v503 = vadd.f32 %v428, %v500
        %504 = vst.msk [vmem:[#allocation4] sm:$0xff] %vm319, %v503
        %505 = vst.msk [vmem:[#allocation2] sm:$0xff] %vm420, %v402
        // Predicated region
        $region49: #{tpu_custom_call.1} parent=31 // pred_check
          %p506 = pneg %p308
        $region50: #{tpu_custom_call.1} parent=31 // pred_check_branch
          %508 = sbr.rel (%p506) target = $region52
        $region51: #{tpu_custom_call.1} parent=31 // pred_region
          %v509 = vld [vmem:[#allocation3] sm:$0xff]
          %v510 = vrcp.pop %v509
          %v511 = vld [vmem:[#allocation4] sm:$0xff]
          %513 = vset.pattern.permute.xlu0 0
          %514 = vperm.xlu0 %513, %v510
          %v515 = vpop.permute.xlu0 %514
          %v517 = vmul.f32 %v511, %v515
          %518 = vst.msk [vmem:[%s307] sm:$0xff] %vm319, %v517
        $region52: #{tpu_custom_call.1} parent=31 // pred_fallthru
          _
        %s519 = sand.u32 %s151, 1
        %s520 = scalar_lea.sflag [#allocation7], %s519
        %s521 = sand.u32 %s151, 1
        %s522 = smul.addr %s521, 8
        %s523 = scalar_lea.vmem [#allocation11], %s522
        // Predicated region
        $region53: #{tpu_custom_call.1} parent=31 // pred_check
          %p524 = pneg %p161
        $region54: #{tpu_custom_call.1} parent=31 // pred_check_branch
          %526 = sbr.rel (%p524) target = $region56
        $region55: #{tpu_custom_call.1} parent=31 // pred_region
          %s528 = ssub.s32 128, 128
          %529 = vsyncadd %s520, %s528
          %s530 = sadd.s32 %s31, %s30
          %s531 = smul.addr %s29, 4
          %s532 = sadd.s32 %s530, %s531
          %s533 = smul.addr %s532, 128
          %s534 = scalar_lea.hbm %s3, %s533
          %s536 = sshll.u32 %s523, 4
          %s537 = int_to_ptr.vmem [resolvable:$true] %s536
          %539 = dma.vmem_to_hbm [thread:$0]  %s537, 128, %s534, %s520
        $region56: #{tpu_custom_call.1} parent=31 // pred_fallthru
          _
      $region32: #{tpu_custom_call.1} parent=5 // pred_fallthru
        _
      %p540 = scmp.le.s32.totalorder 2, %s18
      // Predicated region
      $region57: #{tpu_custom_call.1} parent=5 // pred_check
        %p541 = pneg %p540
      $region58: #{tpu_custom_call.1} parent=5 // pred_check_branch
        %543 = sbr.rel (%p541) target = $region60
      $region59: #{tpu_custom_call.1} parent=5 // pred_region
        %s544 = ssub.s32 %s18, 2
        // Predicated region
        $region61: #{tpu_custom_call.1} parent=59 // pred_check
          %p545 = pneg %p167
        $region62: #{tpu_custom_call.1} parent=59 // pred_check_branch
          %547 = sbr.rel (%p545) target = $region64
        $region63: #{tpu_custom_call.1} parent=59 // pred_region
          %s548 = sand.u32 %s152, 1
          %s549 = scalar_lea.sflag [#allocation7], %s548
          %s550 = sand.u32 %s152, 1
          %s551 = smul.addr %s550, 8
          %s552 = scalar_lea.vmem [#allocation11], %s551
          %553 = dma.done %s549, 128
        $region64: #{tpu_custom_call.1} parent=59 // pred_fallthru
          _
      $region60: #{tpu_custom_call.1} parent=5 // pred_fallthru
        _
    $region6: #{tpu_custom_call.1} parent=1 // loop_footer
      %s22 = sadd.s32 1, %s18
    $region7: #{tpu_custom_call.1} parent=1 // loop_footer_branch
      %17 = sbr.rel target = $region3
    $region8: #{tpu_custom_call.1} parent=1 // loop_exit
      _
    %554 = vsyncpa [#allocation6], 1
    %s555 = scalar_lea.sflag [#allocation6], 1
    %556 = vsyncpa %s555, 1
    %557 = vsyncpa [#allocation9], 1
    %s558 = scalar_lea.sflag [#allocation9], 1
    %559 = vsyncpa %s558, 1
    %560 = vsyncpa [#allocation7], 1
    %s561 = scalar_lea.sflag [#allocation7], 1
    %562 = vsyncpa %s561, 1

</llo_original>
